<compile_context>
chip_gen: v7x
topology: tpu7x:2x2x1
jax: 0.10.0
libtpu: 0.0.40
codegen_flags: <defaults>
</compile_context>

<pallas_src>
import functools

import jax
import jax.numpy as jnp
from jax.experimental import pallas as pl
from jax.experimental.pallas import tpu as pltpu

_LANE = 128
_SUBLANE = 8


def _round_up(x, m):
    return (x + m - 1) // m * m


def _ffn_kernel(x_ref, w1_ref, b1_ref, w2_ref, b2_ref, o_ref, acc_ref, *,
                approx_swish):
    # x_ref:  (tm, dim_p)   row tile (original activation dtype; k-invariant)
    # w1_ref: (dim_p, tk)   hidden chunk of W1 (MXU dtype, e.g. bf16)
    # b1_ref: (1, tk)       f32
    # w2_ref: (tk, dim_p)   hidden chunk of W2 (MXU dtype)
    # b2_ref: (1, dim_p)    f32
    # o_ref:  (tm, dim_p)
    # acc_ref:(tm, dim_p)   f32 accumulator scratch
    k = pl.program_id(1)

    @pl.when(k == 0)
    def _():
        acc_ref[...] = jnp.zeros_like(acc_ref)

    # Use exact f32 matmul passes only when the operands really are f32.
    prec = jax.lax.Precision.HIGHEST if w1_ref.dtype == jnp.float32 else None

    # Linear 1 (this hidden chunk): MXU in weight dtype, f32 accumulation.
    h = jnp.dot(x_ref[...].astype(w1_ref.dtype), w1_ref[...],
                precision=prec, preferred_element_type=jnp.float32)
    h = h + b1_ref[...]

    # Swish in f32: h * sigmoid(h).  exp + reciprocal stay on the EUP slot.
    if approx_swish:
        gate = pl.reciprocal(1.0 + jnp.exp(-h), approx=True)
    else:
        gate = 1.0 / (1.0 + jnp.exp(-h))
    h = h * gate

    # Linear 2 partial product over this hidden chunk, accumulated in f32.
    acc_ref[...] += jnp.dot(h.astype(w2_ref.dtype), w2_ref[...],
                            precision=prec, preferred_element_type=jnp.float32)

    @pl.when(k == pl.num_programs(1) - 1)
    def _():
        o_ref[...] = (acc_ref[...] + b2_ref[...]).astype(o_ref.dtype)


def prepare_ffn_params(w1, b1, w2, b2, *, mxu_dtype=jnp.bfloat16):
    """Pad to lane-dense shapes and cast ONCE, outside the per-call path.

    w1: (dim, hidden), b1: (hidden,), w2: (hidden, dim), b2: (dim,)
    Zero padding is exact: padded x columns hit zero W1 rows, swish(0) = 0
    kills padded hidden columns, padded output columns are sliced away.
    """
    dim, hidden = w1.shape
    dim_p = _round_up(dim, _LANE)
    hidden_p = _round_up(hidden, _LANE)
    wdt = w1.dtype if mxu_dtype is None else mxu_dtype
    w1p = jnp.pad(w1.astype(wdt), ((0, dim_p - dim), (0, hidden_p - hidden)))
    w2p = jnp.pad(w2.astype(wdt), ((0, hidden_p - hidden), (0, dim_p - dim)))
    b1p = jnp.pad(b1.astype(jnp.float32), (0, hidden_p - hidden)).reshape(1, hidden_p)
    b2p = jnp.pad(b2.astype(jnp.float32), (0, dim_p - dim)).reshape(1, dim_p)
    return {"w1": w1p, "b1": b1p, "w2": w2p, "b2": b2p}


def feed_forward_pallas(x, params, *, tile_m=256,
                        vmem_budget_bytes=40 * 1024 * 1024,
                        approx_swish=True):
    """Conformer FeedForward forward pass.  x: (B, S, dim)."""
    w1, b1, w2, b2 = params["w1"], params["b1"], params["w2"], params["b2"]
    B, S, dim = x.shape
    dim_p, hidden_p = w1.shape
    out_dtype = x.dtype

    M = B * S
    x2d = x.reshape(M, dim)

    # Pad rows only to a sublane multiple and feature columns only if needed
    # (no full-tensor pad of x to a row-tile multiple).
    M_p = _round_up(M, _SUBLANE)
    if (M_p, dim_p) != (M, dim):
        x2d = jnp.pad(x2d, ((0, M_p - M), (0, dim_p - dim)))

    # Row tile: large, capped by the row count; guarantee >= 2 tiles so the
    # "parallel" row axis can feed both v7x TensorCores.
    tm = _round_up(min(tile_m, M_p), _SUBLANE)
    if pl.cdiv(M_p, tm) < 2 and M_p >= 2 * _SUBLANE:
        tm = _round_up(pl.cdiv(M_p, 2), _SUBLANE)
    num_m = pl.cdiv(M_p, tm)

    x_bytes = jnp.dtype(x2d.dtype).itemsize
    w_bytes = jnp.dtype(w1.dtype).itemsize
    o_bytes = jnp.dtype(out_dtype).itemsize

    def _vmem_est(tk, nk):
        wbuf = 1 if nk == 1 else 2             # single-buffer constant-index weights
        e = 2 * tm * dim_p * x_bytes           # x tile (double-buffered)
        e += wbuf * dim_p * tk * w_bytes       # W1 chunk
        e += wbuf * tk * dim_p * w_bytes       # W2 chunk
        e += wbuf * _SUBLANE * tk * 4          # b1 (sublane-padded)
        e += _SUBLANE * dim_p * 4              # b2 (single-buffered)
        e += 2 * tm * dim_p * o_bytes          # out tile
        e += tm * dim_p * 4                    # f32 accumulator scratch
        e += 2 * tm * tk * 4                   # h intermediate + slack
        return e

    # Hidden chunk: largest divisor of hidden_p (multiple of 128) whose working
    # set fits the budget.  nk == 1 keeps the weights fully resident.
    n_lanes = hidden_p // _LANE
    tk = _LANE
    for d in range(n_lanes, 0, -1):
        if n_lanes % d == 0 and _vmem_est(d * _LANE, n_lanes // d) <= vmem_budget_bytes:
            tk = d * _LANE
            break
    num_k = hidden_p // tk
    est = _vmem_est(tk, num_k)

    # Request a bounded VMEM limit: enough headroom over the estimate, but
    # never more than 56 MiB so it also fits v7x's 64 MiB per-TC VMEM.
    vmem_limit = int(min(max(est + est // 4 + (4 << 20), 32 << 20), 56 << 20))

    buf1 = {"pipeline_mode": pl.Buffered(1)}
    w_mode = buf1 if num_k == 1 else {}        # weights constant-index iff nk == 1

    weight_reads = 1 if num_k == 1 else num_m
    cost = pl.CostEstimate(
        flops=4 * M_p * dim_p * hidden_p,
        transcendentals=M_p * hidden_p,
        bytes_accessed=(M_p * dim_p * (x_bytes + o_bytes)
                        + weight_reads * 2 * dim_p * hidden_p * w_bytes),
    )

    kernel = functools.partial(_ffn_kernel, approx_swish=approx_swish)

    out2d = pl.pallas_call(
        kernel,
        out_shape=jax.ShapeDtypeStruct((M_p, dim_p), out_dtype),
        grid_spec=pltpu.PrefetchScalarGridSpec(
            num_scalar_prefetch=0,
            grid=(num_m, num_k),
            in_specs=[
                pl.BlockSpec((tm, dim_p), lambda i, k: (i, 0)),            # x (k-invariant)
                pl.BlockSpec((dim_p, tk), lambda i, k: (0, k), **w_mode),  # W1 chunk
                pl.BlockSpec((1, tk), lambda i, k: (0, k), **w_mode),      # b1 chunk
                pl.BlockSpec((tk, dim_p), lambda i, k: (k, 0), **w_mode),  # W2 chunk
                pl.BlockSpec((1, dim_p), lambda i, k: (0, 0), **buf1),     # b2
            ],
            out_specs=pl.BlockSpec((tm, dim_p), lambda i, k: (i, 0)),
            scratch_shapes=[pltpu.VMEM((tm, dim_p), jnp.float32)],
        ),
        compiler_params=pltpu.CompilerParams(
            dimension_semantics=("parallel", "arbitrary"),
            vmem_limit_bytes=vmem_limit,
        ),
        cost_estimate=cost,
    )(x2d, w1, b1, w2, b2)

    return out2d[:M, :dim].reshape(B, S, dim)


def feed_forward_ref(x, w1, b1, w2, b2):
    hp = jax.lax.Precision.HIGHEST
    h = jnp.einsum("bsd,dh->bsh", x, w1, precision=hp) + b1
    h = h * jax.nn.sigmoid(h)
    return jnp.einsum("bsh,hd->bsd", h, w2, precision=hp) + b2


def init_params(key, dim, mult):
    """PyTorch nn.Linear-style init (uniform +-1/sqrt(fan_in)); weights stored
    transposed, i.e. (in_features, out_features), so the kernel does x @ W."""
    hidden = dim * mult
    k1, k2, k3, k4 = jax.random.split(key, 4)
    bound1 = 1.0 / (dim ** 0.5)
    bound2 = 1.0 / (hidden ** 0.5)
    w1 = jax.random.uniform(k1, (dim, hidden), jnp.float32, -bound1, bound1)
    b1 = jax.random.uniform(k2, (hidden,), jnp.float32, -bound1, bound1)
    w2 = jax.random.uniform(k3, (hidden, dim), jnp.float32, -bound2, bound2)
    b2 = jax.random.uniform(k4, (dim,), jnp.float32, -bound2, bound2)
    return w1, b1, w2, b2


if __name__ == "__main__":
    key = jax.random.PRNGKey(0)
    kx, kp = jax.random.split(key)

    # Small, lane-friendly shapes: dim=128 (one lane), hidden = dim*4 = 512.
    batch, seq, dim, mult = 2, 8, 128, 4

    x = jax.random.normal(kx, (batch, seq, dim), jnp.float32)
    w1, b1, w2, b2 = init_params(kp, dim, mult)
    ref = feed_forward_ref(x, w1, b1, w2, b2)

    # Default path: bf16 MXU operands (prepared/cast once), EUP-approx Swish.
    params_bf16 = prepare_ffn_params(w1, b1, w2, b2, mxu_dtype=jnp.bfloat16)
    ffn = jax.jit(functools.partial(feed_forward_pallas, tile_m=256))
    out = jax.block_until_ready(ffn(x, params_bf16))
    assert out.shape == (batch, seq, dim)
    assert jnp.allclose(out, ref, atol=5e-2, rtol=5e-2), "bf16 path mismatch vs. reference"

    # f32-operand path with exact sigmoid: tight-tolerance correctness check.
    params_f32 = prepare_ffn_params(w1, b1, w2, b2, mxu_dtype=None)
    ffn_f32 = jax.jit(functools.partial(feed_forward_pallas, tile_m=256,
                                        approx_swish=False))
    out_f32 = jax.block_until_ready(ffn_f32(x, params_f32))
    assert out_f32.shape == (batch, seq, dim)
    assert jnp.allclose(out_f32, ref, atol=1e-4, rtol=1e-4), "f32 path mismatch vs. reference"

    print("KERNEL_OK")
</pallas_src>

<mosaic_0001>
module attributes {stable_mosaic.version = 11 : i64} {
  func.func @_ffn_kernel(%arg0: i32, %arg1: i32, %arg2: memref<8x128xf32, #tpu.memory_space<vmem>>, %arg3: memref<128x512xbf16, #tpu.memory_space<vmem>>, %arg4: memref<1x512xf32, #tpu.memory_space<vmem>>, %arg5: memref<512x128xbf16, #tpu.memory_space<vmem>>, %arg6: memref<1x128xf32, #tpu.memory_space<vmem>>, %arg7: memref<8x128xf32, #tpu.memory_space<vmem>>, %arg8: memref<8x128xf32, #tpu.memory_space<vmem>>) attributes {dimension_semantics = [#tpu.dimension_semantics<parallel>, #tpu.dimension_semantics<arbitrary>], iteration_bounds = array<i64: 2, 1>, scalar_prefetch = 0 : i64, scratch_operands = 1 : i64, tpu.core_type = #tpu.core_type<tc>, window_params = [{transform_indices = @transform_0, window_bounds = array<i64: 8, 128>}, {pipeline_mode = #tpu.pipeline_mode<synchronous>, transform_indices = @transform_1, window_bounds = array<i64: 128, 512>}, {pipeline_mode = #tpu.pipeline_mode<synchronous>, transform_indices = @transform_2, window_bounds = array<i64: 1, 512>}, {pipeline_mode = #tpu.pipeline_mode<synchronous>, transform_indices = @transform_3, window_bounds = array<i64: 512, 128>}, {pipeline_mode = #tpu.pipeline_mode<synchronous>, transform_indices = @transform_4, window_bounds = array<i64: 1, 128>}, {transform_indices = @transform_5, window_bounds = array<i64: 8, 128>}]} {
    %c0_i32 = arith.constant 0 : i32
    %0 = arith.cmpi eq, %arg1, %c0_i32 : i32
    %1 = arith.extui %0 : i1 to i32
    %c0_i32_0 = arith.constant 0 : i32
    %2 = arith.cmpi ne, %1, %c0_i32_0 : i32
    scf.if %2 {
      %cst_17 = arith.constant 0.000000e+00 : f32
      %26 = vector.broadcast %cst_17 : f32 to vector<8x128xf32>
      %c0_18 = arith.constant 0 : index
      %c0_19 = arith.constant 0 : index
      %27 = vector.load %arg8[%c0_18, %c0_19] : memref<8x128xf32, #tpu.memory_space<vmem>>, vector<8x128xf32>
      tpu.vector_store %arg8[%c0_18, %c0_19], %26 {strides = array<i32>} : memref<8x128xf32, #tpu.memory_space<vmem>>, vector<8x128xf32>,
    } else {
    }
    %c0 = arith.constant 0 : index
    %c0_1 = arith.constant 0 : index
    %3 = vector.load %arg2[%c0, %c0_1] : memref<8x128xf32, #tpu.memory_space<vmem>>, vector<8x128xf32>
    %4 = arith.truncf %3 : vector<8x128xf32> to vector<8x128xbf16>
    %c0_2 = arith.constant 0 : index
    %c0_3 = arith.constant 0 : index
    %5 = vector.load %arg3[%c0_2, %c0_3] : memref<128x512xbf16, #tpu.memory_space<vmem>>, vector<128x512xbf16>
    %cst = arith.constant dense<0.000000e+00> : vector<8x512xf32>
    %6 = tpu.matmul %4, %5, %cst {dimension_numbers = #tpu.dot_dimension_numbers<[1], [0], [0], [1], [0, 0, 1, 1], [], []>} : vector<8x128xbf16>, vector<128x512xbf16>, vector<8x512xf32> -> vector<8x512xf32>
    %c0_4 = arith.constant 0 : index
    %c0_5 = arith.constant 0 : index
    %7 = vector.load %arg4[%c0_4, %c0_5] : memref<1x512xf32, #tpu.memory_space<vmem>>, vector<1x512xf32>
    %8 = vector.broadcast %7 : vector<1x512xf32> to vector<8x512xf32>
    %9 = arith.addf %6, %8 : vector<8x512xf32>
    %cst_6 = arith.constant 0.000000e+00 : f32
    %10 = vector.broadcast %cst_6 : f32 to vector<8x512xf32>
    %11 = arith.subf %10, %9 : vector<8x512xf32>
    %12 = math.exp %11 : vector<8x512xf32>
    %cst_7 = arith.constant 1.000000e+00 : f32
    %13 = vector.broadcast %cst_7 : f32 to vector<8x512xf32>
    %14 = arith.addf %13, %12 : vector<8x512xf32>
    %15 = tpu.reciprocal %14 {approx = true} : vector<8x512xf32> -> vector<8x512xf32>
    %16 = arith.mulf %9, %15 : vector<8x512xf32>
    %c0_8 = arith.constant 0 : index
    %c0_9 = arith.constant 0 : index
    %17 = vector.load %arg8[%c0_8, %c0_9] : memref<8x128xf32, #tpu.memory_space<vmem>>, vector<8x128xf32>
    %18 = arith.truncf %16 : vector<8x512xf32> to vector<8x512xbf16>
    %c0_10 = arith.constant 0 : index
    %c0_11 = arith.constant 0 : index
    %19 = vector.load %arg5[%c0_10, %c0_11] : memref<512x128xbf16, #tpu.memory_space<vmem>>, vector<512x128xbf16>
    %cst_12 = arith.constant dense<0.000000e+00> : vector<8x128xf32>
    %20 = tpu.matmul %18, %19, %cst_12 {dimension_numbers = #tpu.dot_dimension_numbers<[1], [0], [0], [1], [0, 0, 1, 1], [], []>} : vector<8x512xbf16>, vector<512x128xbf16>, vector<8x128xf32> -> vector<8x128xf32>
    %21 = arith.addf %17, %20 : vector<8x128xf32>
    %c0_13 = arith.constant 0 : index
    %c0_14 = arith.constant 0 : index
    %22 = vector.load %arg8[%c0_13, %c0_14] : memref<8x128xf32, #tpu.memory_space<vmem>>, vector<8x128xf32>
    tpu.vector_store %arg8[%c0_13, %c0_14], %21 {strides = array<i32>} : memref<8x128xf32, #tpu.memory_space<vmem>>, vector<8x128xf32>,
    %c0_i32_15 = arith.constant 0 : i32
    %23 = arith.cmpi eq, %arg1, %c0_i32_15 : i32
    %24 = arith.extui %23 : i1 to i32
    %c0_i32_16 = arith.constant 0 : i32
    %25 = arith.cmpi ne, %24, %c0_i32_16 : i32
    scf.if %25 {
      %c0_17 = arith.constant 0 : index
      %c0_18 = arith.constant 0 : index
      %26 = vector.load %arg8[%c0_17, %c0_18] : memref<8x128xf32, #tpu.memory_space<vmem>>, vector<8x128xf32>
      %c0_19 = arith.constant 0 : index
      %c0_20 = arith.constant 0 : index
      %27 = vector.load %arg6[%c0_19, %c0_20] : memref<1x128xf32, #tpu.memory_space<vmem>>, vector<1x128xf32>
      %28 = vector.broadcast %27 : vector<1x128xf32> to vector<8x128xf32>
      %29 = arith.addf %26, %28 : vector<8x128xf32>
      %c0_21 = arith.constant 0 : index
      %c0_22 = arith.constant 0 : index
      %30 = vector.load %arg7[%c0_21, %c0_22] : memref<8x128xf32, #tpu.memory_space<vmem>>, vector<8x128xf32>
      tpu.vector_store %arg7[%c0_21, %c0_22], %29 {strides = array<i32>} : memref<8x128xf32, #tpu.memory_space<vmem>>, vector<8x128xf32>,
    } else {
    }
    return
  }
  func.func @transform_0(%arg0: i32, %arg1: i32) -> (i32, i32) {
    %c0_i32 = arith.constant 0 : i32
    %c0_i32_0 = arith.constant 0 : i32
    return %arg0, %c0_i32 : i32, i32
  }
  func.func @transform_1(%arg0: i32, %arg1: i32) -> (i32, i32) {
    %c0_i32 = arith.constant 0 : i32
    %c0_i32_0 = arith.constant 0 : i32
    return %c0_i32, %arg1 : i32, i32
  }
  func.func @transform_2(%arg0: i32, %arg1: i32) -> (i32, i32) {
    %c0_i32 = arith.constant 0 : i32
    %c0_i32_0 = arith.constant 0 : i32
    return %c0_i32, %arg1 : i32, i32
  }
  func.func @transform_3(%arg0: i32, %arg1: i32) -> (i32, i32) {
    %c0_i32 = arith.constant 0 : i32
    %c0_i32_0 = arith.constant 0 : i32
    return %arg1, %c0_i32 : i32, i32
  }
  func.func @transform_4(%arg0: i32, %arg1: i32) -> (i32, i32) {
    %c0_i32 = arith.constant 0 : i32
    %c0_i32_0 = arith.constant 0 : i32
    %c0_i32_1 = arith.constant 0 : i32
    return %c0_i32, %c0_i32_0 : i32, i32
  }
  func.func @transform_5(%arg0: i32, %arg1: i32) -> (i32, i32) {
    %c0_i32 = arith.constant 0 : i32
    %c0_i32_0 = arith.constant 0 : i32
    return %arg0, %c0_i32 : i32, i32
  }
}

</mosaic_0001>

<llo_original>
// kernel: feed_forward_pallas.1
$region0: #{feed_forward_pallas.1}
  #allocation0 [shape = 'u32[]', space=smem, size = 0x4, offset = 0x4, fixed_abs, tag = 'smem constant byte address 0x4 - core index']
  #allocation1 [shape = 'u32[144,128]{1,0:T(1,128)}', space=vmem, size = 0x12000, scoped, tag = 'internal scratch']
  #allocation2 [shape = 'f32[8,128]{1,0:T(8,128)}', space=vmem, size = 0x1000, scoped, tag = 'scratch operand']
  %s0 = inlined_call_operand.hbm [shape: f32[16,128], index: 0, kind: input, shape index: {}]
  %s1 = inlined_call_operand.hbm [shape: bf16[128,512], index: 1, kind: input, shape index: {}]
  %s2 = inlined_call_operand.vmem [shape: f32[1,512], index: 2, kind: input, shape index: {}]
  %s3 = inlined_call_operand.hbm [shape: bf16[512,128], index: 3, kind: input, shape index: {}]
  %s4 = inlined_call_operand.vmem [shape: f32[1,128], index: 4, kind: input, shape index: {}]
  %s5 = inlined_call_operand.hbm [shape: f32[16,128], index: 5, kind: output, shape index: {}]
  %s6 = sld [smem:[#allocation0]]
  $region73: #{feed_forward_pallas.1} parent=0
    _
  %s8 = ssub.s32 1, %s6
  %s9 = scalar_select 0, %s8, %s6
  $region1: #{feed_forward_pallas.1} parent=0
    #allocation3 [shape = 'u8[8192]{0}', space=vmem, size = 0x2000, scoped, tag = 'input window, operand 0']
    #allocation4 [shape = 's32[2]{0}', space=sflag, size = 0x8, scoped, tag = 'scoped memory for feed_forward_pallas.1']
    #allocation5 [shape = 's32[2]{0}', space=sflag, size = 0x8, scoped, tag = 'scoped memory for feed_forward_pallas.1']
    #allocation6 [shape = 'u8[131072]{0}', space=vmem, size = 0x20000, scoped, tag = 'input window, operand 1, single buffered']
    #allocation7 [shape = 's32[1]{0}', space=sflag, size = 0x4, scoped, tag = 'scoped memory for feed_forward_pallas.1']
    #allocation8 [shape = 'u8[131072]{0}', space=vmem, size = 0x20000, scoped, tag = 'input window, operand 3, single buffered']
    #allocation9 [shape = 'u8[8192]{0}', space=vmem, size = 0x2000, scoped, tag = 'output window, operand 0']
    %10 = vsyncpa [#allocation4], 0
    %s11 = scalar_lea.sflag [#allocation4], 1
    %12 = vsyncpa %s11, 0
    %13 = vsyncpa [#allocation7], 0
    %14 = vsyncpa [#allocation5], 0
    %s15 = scalar_lea.sflag [#allocation5], 1
    %16 = vsyncpa %s15, 0
    loop: start=0, step=1, limit=4
    $region2: #{feed_forward_pallas.1} parent=1 // loop_pre_header
      _
    $region3: #{feed_forward_pallas.1} parent=1 // loop_header
      %s18 = sphi 0, %s22
      %p19 = scmp.ge.s32.totalorder %s18, 4
      %s25 = sphi 0, %s37
      %s26 = sphi 0, %s33
      %s27 = sphi 0, %s25
      %s28 = sphi 0, %s26
      %s29 = sphi 0, %s27
      %s30 = sphi 0, %s28
      %s40 = sphi 0, %s42
      %s43 = sphi 0, %s40
      %s44 = sphi 0, %s43
      %s60 = sphi 0, %s44
      %s66 = sphi 0, %s68
      %s69 = sphi 0, %s66
      %s70 = sphi 0, %s69
      %s86 = sphi 0, %s70
      %s92 = sphi 0, %s94
      %s95 = sphi 0, %s92
      %s96 = sphi 0, %s95
      %s112 = sphi 0, %s96
      %s118 = sphi 0, %s120
      %s121 = sphi 0, %s118
      %s122 = sphi 0, %s121
      %s138 = sphi 0, %s122
      %s142 = sphi 0, %s142
      %s144 = sphi 0, %s142
      %s145 = sphi 0, %s144
      %s159 = sphi 0, %s145
      %s165 = sphi 0, %s167
      %s168 = sphi 0, %s165
      %s169 = sphi 0, %s168
      %s185 = sphi 0, %s169
    $region4: #{feed_forward_pallas.1} parent=1 // loop_header_branch
      %21 = sbr.rel (%p19) target = $region8
    $region5: #{feed_forward_pallas.1} parent=1 // loop_body
      %s23 = ssub.s32 %s18, 1
      %s24 = ssub.s32 %s18, 2
      %s31 = sadd.s32 1, %s26
      %p32 = scmp.ge.s32.totalorder %s31, 1
      %s33 = scalar_select %p32, 0, %s31
      %s34 = sadd.s32 1, %s25
      %s35 = scalar_select %p32, %s34, %s25
      %p36 = scmp.ge.s32.totalorder %s35, 2
      %s37 = scalar_select %p36, 0, %s35
      %s38 = ssub.s32 %s25, %s37
      %p39 = scmp.eq.s32.totalorder %s38, 0
      %s41 = sadd.s32 %s40, 1
      %s42 = scalar_select %p39, %s40, %s41
      %p45 = pneg %p39
      %p46 = scmp.eq.s32.totalorder %s18, 1
      %p47 = por %p45, %p46
      %p48 = scmp.ne.s32.totalorder %s40, %s43
      %p49 = scmp.eq.s32.totalorder %s18, 0
      %p50 = por %p48, %p49
      %p51 = scmp.ne.s32.totalorder %s40, %s43
      %p52 = scmp.eq.s32.totalorder %s23, 1
      %p53 = por %p51, %p52
      %p54 = scmp.ne.s32.totalorder %s43, %s44
      %p55 = scmp.eq.s32.totalorder %s23, 0
      %p56 = por %p54, %p55
      %p57 = scmp.ne.s32.totalorder %s43, %s44
      %p58 = scmp.eq.s32.totalorder %s24, 1
      %p59 = por %p57, %p58
      %p61 = scmp.ne.s32.totalorder %s44, %s60
      %p62 = scmp.eq.s32.totalorder %s24, 0
      %p63 = por %p61, %p62
      %s64 = ssub.s32 %s26, %s33
      %p65 = scmp.eq.s32.totalorder %s64, 0
      %s67 = sadd.s32 %s66, 1
      %s68 = scalar_select %p65, %s66, %s67
      %p71 = pneg %p65
      %p72 = scmp.eq.s32.totalorder %s18, 1
      %p73 = por %p71, %p72
      %p74 = scmp.ne.s32.totalorder %s66, %s69
      %p75 = scmp.eq.s32.totalorder %s18, 0
      %p76 = por %p74, %p75
      %p77 = scmp.ne.s32.totalorder %s66, %s69
      %p78 = scmp.eq.s32.totalorder %s23, 1
      %p79 = por %p77, %p78
      %p80 = scmp.ne.s32.totalorder %s69, %s70
      %p81 = scmp.eq.s32.totalorder %s23, 0
      %p82 = por %p80, %p81
      %p83 = scmp.ne.s32.totalorder %s69, %s70
      %p84 = scmp.eq.s32.totalorder %s24, 1
      %p85 = por %p83, %p84
      %p87 = scmp.ne.s32.totalorder %s70, %s86
      %p88 = scmp.eq.s32.totalorder %s24, 0
      %p89 = por %p87, %p88
      %s90 = ssub.s32 %s26, %s33
      %p91 = scmp.eq.s32.totalorder %s90, 0
      %s93 = sadd.s32 %s92, 1
      %s94 = scalar_select %p91, %s92, %s93
      %p97 = pneg %p91
      %p98 = scmp.eq.s32.totalorder %s18, 1
      %p99 = por %p97, %p98
      %p100 = scmp.ne.s32.totalorder %s92, %s95
      %p101 = scmp.eq.s32.totalorder %s18, 0
      %p102 = por %p100, %p101
      %p103 = scmp.ne.s32.totalorder %s92, %s95
      %p104 = scmp.eq.s32.totalorder %s23, 1
      %p105 = por %p103, %p104
      %p106 = scmp.ne.s32.totalorder %s95, %s96
      %p107 = scmp.eq.s32.totalorder %s23, 0
      %p108 = por %p106, %p107
      %p109 = scmp.ne.s32.totalorder %s95, %s96
      %p110 = scmp.eq.s32.totalorder %s24, 1
      %p111 = por %p109, %p110
      %p113 = scmp.ne.s32.totalorder %s96, %s112
      %p114 = scmp.eq.s32.totalorder %s24, 0
      %p115 = por %p113, %p114
      %s116 = ssub.s32 %s26, %s33
      %p117 = scmp.eq.s32.totalorder %s116, 0
      %s119 = sadd.s32 %s118, 1
      %s120 = scalar_select %p117, %s118, %s119
      %p123 = pneg %p117
      %p124 = scmp.eq.s32.totalorder %s18, 1
      %p125 = por %p123, %p124
      %p126 = scmp.ne.s32.totalorder %s118, %s121
      %p127 = scmp.eq.s32.totalorder %s18, 0
      %p128 = por %p126, %p127
      %p129 = scmp.ne.s32.totalorder %s118, %s121
      %p130 = scmp.eq.s32.totalorder %s23, 1
      %p131 = por %p129, %p130
      %p132 = scmp.ne.s32.totalorder %s121, %s122
      %p133 = scmp.eq.s32.totalorder %s23, 0
      %p134 = por %p132, %p133
      %p135 = scmp.ne.s32.totalorder %s121, %s122
      %p136 = scmp.eq.s32.totalorder %s24, 1
      %p137 = por %p135, %p136
      %p139 = scmp.ne.s32.totalorder %s122, %s138
      %p140 = scmp.eq.s32.totalorder %s24, 0
      %p141 = por %p139, %p140
      %s143 = sadd.s32 %s142, 1
      %p146 = scmp.eq.s32.totalorder %s18, 1
      %p147 = scmp.ne.s32.totalorder %s142, %s144
      %p148 = scmp.eq.s32.totalorder %s18, 0
      %p149 = por %p147, %p148
      %p150 = scmp.ne.s32.totalorder %s142, %s144
      %p151 = scmp.eq.s32.totalorder %s23, 1
      %p152 = por %p150, %p151
      %p153 = scmp.ne.s32.totalorder %s144, %s145
      %p154 = scmp.eq.s32.totalorder %s23, 0
      %p155 = por %p153, %p154
      %p156 = scmp.ne.s32.totalorder %s144, %s145
      %p157 = scmp.eq.s32.totalorder %s24, 1
      %p158 = por %p156, %p157
      %p160 = scmp.ne.s32.totalorder %s145, %s159
      %p161 = scmp.eq.s32.totalorder %s24, 0
      %p162 = por %p160, %p161
      %s163 = ssub.s32 %s25, %s37
      %p164 = scmp.eq.s32.totalorder %s163, 0
      %s166 = sadd.s32 %s165, 1
      %s167 = scalar_select %p164, %s165, %s166
      %p170 = pneg %p164
      %p171 = scmp.eq.s32.totalorder %s18, 1
      %p172 = por %p170, %p171
      %p173 = scmp.ne.s32.totalorder %s165, %s168
      %p174 = scmp.eq.s32.totalorder %s18, 0
      %p175 = por %p173, %p174
      %p176 = scmp.ne.s32.totalorder %s165, %s168
      %p177 = scmp.eq.s32.totalorder %s23, 1
      %p178 = por %p176, %p177
      %p179 = scmp.ne.s32.totalorder %s168, %s169
      %p180 = scmp.eq.s32.totalorder %s23, 0
      %p181 = por %p179, %p180
      %p182 = scmp.ne.s32.totalorder %s168, %s169
      %p183 = scmp.eq.s32.totalorder %s24, 1
      %p184 = por %p182, %p183
      %p186 = scmp.ne.s32.totalorder %s169, %s185
      %p187 = scmp.eq.s32.totalorder %s24, 0
      %p188 = por %p186, %p187
      %p189 = scmp.le.s32.totalorder 1, %s18
      %p190 = scmp.lt.s32.totalorder %s18, 3
      %p191 = pnand %p189, %p190
      %p192 = pneg %p191
      // Predicated region
      $region9: #{feed_forward_pallas.1} parent=5 // pred_check
        _
      $region10: #{feed_forward_pallas.1} parent=5 // pred_check_branch
        %194 = sbr.rel (%p191) target = $region12
      $region11: #{feed_forward_pallas.1} parent=5 // pred_region
        %s195 = ssub.s32 %s18, 1
        // Predicated region
        $region13: #{feed_forward_pallas.1} parent=11 // pred_check
          %p196 = pneg %p82
        $region14: #{feed_forward_pallas.1} parent=11 // pred_check_branch
          %198 = sbr.rel (%p196) target = $region16
        $region15: #{feed_forward_pallas.1} parent=11 // pred_region
          %s199 = smul.u32 4, %s28
          %s201 = ssub.s32 4096, 4096
          %202 = vsyncadd [#allocation7], %s201
          %s203 = smul.addr %s199, 64
          %s204 = scalar_lea.hbm %s1, %s203
          %s205 = sshll.u32 [#allocation6], 4
          %s206 = int_to_ptr.vmem [resolvable:$true] %s205
          %211 = dma.hbm_to_vmem [thread:$0]  %s204, 4096, %s206, [#allocation7], 256, 256, 16
        $region16: #{feed_forward_pallas.1} parent=11 // pred_fallthru
          _
        // Predicated region
        $region17: #{feed_forward_pallas.1} parent=11 // pred_check
          %p212 = pneg %p108
        $region18: #{feed_forward_pallas.1} parent=11 // pred_check_branch
          %214 = sbr.rel (%p212) target = $region20
        $region19: #{feed_forward_pallas.1} parent=11 // pred_region
          %s215 = smul.u32 4, %s28
          %p216 = scmp.lt.s32.totalorder %s215, 3
          %s217 = scalar_select %p216, %s215, 3
          %s218 = scalar_lea.vmem %s2, %s217
          %s219 = smul.u32 4, %s28
        $region20: #{feed_forward_pallas.1} parent=11 // pred_fallthru
          _
        // Predicated region
        $region21: #{feed_forward_pallas.1} parent=11 // pred_check
          %p220 = pneg %p134
        $region22: #{feed_forward_pallas.1} parent=11 // pred_check_branch
          %222 = sbr.rel (%p220) target = $region24
        $region23: #{feed_forward_pallas.1} parent=11 // pred_region
          %s223 = smul.u32 64, %s28
          %s225 = ssub.s32 4096, 4096
          %226 = vsyncadd [#allocation7], %s225
          %s227 = smul.addr %s223, 64
          %s228 = scalar_lea.hbm %s3, %s227
          %s229 = sshll.u32 [#allocation8], 4
          %s230 = int_to_ptr.vmem [resolvable:$true] %s229
          %235 = dma.hbm_to_vmem [thread:$0]  %s228, 4096, %s230, [#allocation7], 64, 64, 4
        $region24: #{feed_forward_pallas.1} parent=11 // pred_fallthru
          _
        // Predicated region
        $region25: #{feed_forward_pallas.1} parent=11 // pred_check
          %p236 = pneg %p155
        $region26: #{feed_forward_pallas.1} parent=11 // pred_check_branch
          %238 = sbr.rel (%p236) target = $region28
        $region27: #{feed_forward_pallas.1} parent=11 // pred_region
          _
        $region28: #{feed_forward_pallas.1} parent=11 // pred_fallthru
          _
      $region12: #{feed_forward_pallas.1} parent=5 // pred_fallthru
        _
      %p239 = scmp.lt.s32.totalorder %s18, 2
      // Predicated region
      $region29: #{feed_forward_pallas.1} parent=5 // pred_check
        %p240 = pneg %p239
      $region30: #{feed_forward_pallas.1} parent=5 // pred_check_branch
        %242 = sbr.rel (%p240) target = $region32
      $region31: #{feed_forward_pallas.1} parent=5 // pred_region
        // Predicated region
        $region33: #{feed_forward_pallas.1} parent=31 // pred_check
          %p243 = pneg %p50
        $region34: #{feed_forward_pallas.1} parent=31 // pred_check_branch
          %245 = sbr.rel (%p243) target = $region36
        $region35: #{feed_forward_pallas.1} parent=31 // pred_region
          %s246 = sand.u32 %s40, 1
          %s247 = scalar_lea.sflag [#allocation4], %s246
          %s248 = sand.u32 %s40, 1
          %s249 = smul.addr %s248, 8
          %s250 = scalar_lea.vmem [#allocation3], %s249
          %s252 = ssub.s32 128, 128
          %253 = vsyncadd %s247, %s252
          %s254 = smul.addr %s25, 128
          %s255 = scalar_lea.hbm %s0, %s254
          %s257 = sshll.u32 %s250, 4
          %s258 = int_to_ptr.vmem [resolvable:$true] %s257
          %260 = dma.hbm_to_vmem [thread:$0]  %s255, 128, %s258, %s247
        $region36: #{feed_forward_pallas.1} parent=31 // pred_fallthru
          _
      $region32: #{feed_forward_pallas.1} parent=5 // pred_fallthru
        _
      %p261 = scmp.le.s32.totalorder 1, %s18
      %p262 = scmp.lt.s32.totalorder %s18, 3
      %p263 = pnand %p261, %p262
      %p264 = pneg %p263
      // Predicated region
      $region37: #{feed_forward_pallas.1} parent=5 // pred_check
        _
      $region38: #{feed_forward_pallas.1} parent=5 // pred_check_branch
        %266 = sbr.rel (%p263) target = $region40
      $region39: #{feed_forward_pallas.1} parent=5 // pred_region
        %s267 = ssub.s32 %s18, 1
        %s268 = sand.u32 %s43, 1
        %s269 = scalar_lea.sflag [#allocation4], %s268
        %s270 = sand.u32 %s43, 1
        %s271 = smul.addr %s270, 8
        %s272 = scalar_lea.vmem [#allocation3], %s271
        // Predicated region
        $region41: #{feed_forward_pallas.1} parent=39 // pred_check
          %p273 = pneg %p56
        $region42: #{feed_forward_pallas.1} parent=39 // pred_check_branch
          %275 = sbr.rel (%p273) target = $region44
        $region43: #{feed_forward_pallas.1} parent=39 // pred_region
          %276 = dma.done %s269, 128
        $region44: #{feed_forward_pallas.1} parent=39 // pred_fallthru
          _
        // Predicated region
        $region45: #{feed_forward_pallas.1} parent=39 // pred_check
          %p277 = pneg %p82
        $region46: #{feed_forward_pallas.1} parent=39 // pred_check_branch
          %279 = sbr.rel (%p277) target = $region48
        $region47: #{feed_forward_pallas.1} parent=39 // pred_region
          %280 = dma.done [#allocation7], 4096
        $region48: #{feed_forward_pallas.1} parent=39 // pred_fallthru
          _
        // Predicated region
        $region49: #{feed_forward_pallas.1} parent=39 // pred_check
          %p281 = pneg %p134
        $region50: #{feed_forward_pallas.1} parent=39 // pred_check_branch
          %283 = sbr.rel (%p281) target = $region52
        $region51: #{feed_forward_pallas.1} parent=39 // pred_region
          %284 = dma.done [#allocation7], 4096
        $region52: #{feed_forward_pallas.1} parent=39 // pred_fallthru
          _
        %s285 = sand.u32 %s43, 1
        %s286 = scalar_lea.sflag [#allocation4], %s285
        %s287 = sand.u32 %s43, 1
        %s288 = smul.addr %s287, 8
        %s289 = scalar_lea.vmem [#allocation3], %s288
        %p290 = pneg %p56
        %p291 = pneg %p53
        %p292 = pneg %p82
        %p293 = pneg %p79
        %s294 = smul.u32 4, %s28
        %p295 = scmp.lt.s32.totalorder %s294, 3
        %s296 = scalar_select %p295, %s294, 3
        %s297 = scalar_lea.vmem %s2, %s296
        %p298 = pneg %p108
        %p299 = pneg %p105
        %p300 = pneg %p134
        %p301 = pneg %p131
        %p302 = pneg %p155
        %p303 = pneg %p152
        %p304 = pneg %p181
        %p305 = pneg %p178
        %s306 = sand.u32 %s168, 1
        %s307 = scalar_lea.sflag [#allocation5], %s306
        %s308 = sand.u32 %s168, 1
        %s309 = smul.addr %s308, 8
        %s310 = scalar_lea.vmem [#allocation9], %s309
        %s311 = smul.u32 4, %s28
        %s312 = smul.u32 4, %s28
        %p313 = scmp.lt.s32.totalorder %s312, 3
        %s314 = scalar_select %p313, %s312, 3
        %s315 = scalar_lea.vmem %s2, %s314
        %s316 = smul.u32 4, %s28
        %s317 = smul.u32 64, %s28
        %p319 = scmp.eq.s32.totalorder %s28, 0
        // Predicated region
        $region53: #{feed_forward_pallas.1} parent=39 // pred_check
          %p320 = pneg %p319
        $region54: #{feed_forward_pallas.1} parent=39 // pred_check_branch
          %322 = sbr.rel (%p320) target = $region56
        $region55: #{feed_forward_pallas.1} parent=39 // pred_region
          %323 = vst [vmem:[#allocation2] sm:$0xff] 0.0
        $region56: #{feed_forward_pallas.1} parent=39 // pred_fallthru
          _
        %v324 = vld [vmem:[%s272] sm:$0xff]
        %v325 = vpack.c.bf16 %v324, %v324
        %v326 = vld [vmem:[#allocation6] sm:$0xff]
        %v327 = vld [vmem:[#allocation6 + $0x8] sm:$0xff]
        %v328 = vld [vmem:[#allocation6 + $0x10] sm:$0xff]
        %v329 = vld [vmem:[#allocation6 + $0x18] sm:$0xff]
        %v330 = vld [vmem:[#allocation6 + $0x20] sm:$0xff]
        %v331 = vld [vmem:[#allocation6 + $0x28] sm:$0xff]
        %v332 = vld [vmem:[#allocation6 + $0x30] sm:$0xff]
        %v333 = vld [vmem:[#allocation6 + $0x38] sm:$0xff]
        %v334 = vld [vmem:[#allocation6 + $0x40] sm:$0xff]
        %v335 = vld [vmem:[#allocation6 + $0x48] sm:$0xff]
        %v336 = vld [vmem:[#allocation6 + $0x50] sm:$0xff]
        %v337 = vld [vmem:[#allocation6 + $0x58] sm:$0xff]
        %v338 = vld [vmem:[#allocation6 + $0x60] sm:$0xff]
        %v339 = vld [vmem:[#allocation6 + $0x68] sm:$0xff]
        %v340 = vld [vmem:[#allocation6 + $0x70] sm:$0xff]
        %v341 = vld [vmem:[#allocation6 + $0x78] sm:$0xff]
        %v342 = vld [vmem:[#allocation6 + $0x80] sm:$0xff]
        %v343 = vld [vmem:[#allocation6 + $0x88] sm:$0xff]
        %v344 = vld [vmem:[#allocation6 + $0x90] sm:$0xff]
        %v345 = vld [vmem:[#allocation6 + $0x98] sm:$0xff]
        %v346 = vld [vmem:[#allocation6 + $0xa0] sm:$0xff]
        %v347 = vld [vmem:[#allocation6 + $0xa8] sm:$0xff]
        %v348 = vld [vmem:[#allocation6 + $0xb0] sm:$0xff]
        %v349 = vld [vmem:[#allocation6 + $0xb8] sm:$0xff]
        %v350 = vld [vmem:[#allocation6 + $0xc0] sm:$0xff]
        %v351 = vld [vmem:[#allocation6 + $0xc8] sm:$0xff]
        %v352 = vld [vmem:[#allocation6 + $0xd0] sm:$0xff]
        %v353 = vld [vmem:[#allocation6 + $0xd8] sm:$0xff]
        %v354 = vld [vmem:[#allocation6 + $0xe0] sm:$0xff]
        %v355 = vld [vmem:[#allocation6 + $0xe8] sm:$0xff]
        %v356 = vld [vmem:[#allocation6 + $0xf0] sm:$0xff]
        %v357 = vld [vmem:[#allocation6 + $0xf8] sm:$0xff]
        %v358 = vld [vmem:[%s315] sm:$0xf]
        %v360 = vlaneseq
        %v361 = vshrl.u32 %v360, 7
        %v362 = vsub.s32 0, %v361
        %v363 = vrot.slane %v358, %v362
        %v364 = vlaneseq
        %v365 = vshrl.u32 %v364, 7
        %v366 = vsub.s32 1, %v365
        %v367 = vrot.slane %v358, %v366
        %v368 = vlaneseq
        %v369 = vshrl.u32 %v368, 7
        %v370 = vsub.s32 2, %v369
        %v371 = vrot.slane %v358, %v370
        %v372 = vlaneseq
        %v373 = vshrl.u32 %v372, 7
        %v374 = vsub.s32 3, %v373
        %v375 = vrot.slane %v358, %v374
        %v412 = vunpack.c.l.b16 %v326
        %v413 = vunpack.c.h.b16 %v326
        %v414 = vunpack.c.l.b16 %v327
        %v415 = vunpack.c.h.b16 %v327
        %v416 = vunpack.c.l.b16 %v328
        %v417 = vunpack.c.h.b16 %v328
        %v418 = vunpack.c.l.b16 %v329
        %v419 = vunpack.c.h.b16 %v329
        %v420 = vunpack.c.l.b16 %v330
        %v421 = vunpack.c.h.b16 %v330
        %v422 = vunpack.c.l.b16 %v331
        %v423 = vunpack.c.h.b16 %v331
        %v424 = vunpack.c.l.b16 %v332
        %v425 = vunpack.c.h.b16 %v332
        %v426 = vunpack.c.l.b16 %v333
        %v427 = vunpack.c.h.b16 %v333
        %v428 = vunpack.c.l.b16 %v334
        %v429 = vunpack.c.h.b16 %v334
        %v430 = vunpack.c.l.b16 %v335
        %v431 = vunpack.c.h.b16 %v335
        %v432 = vunpack.c.l.b16 %v336
        %v433 = vunpack.c.h.b16 %v336
        %v434 = vunpack.c.l.b16 %v337
        %v435 = vunpack.c.h.b16 %v337
        %v436 = vunpack.c.l.b16 %v338
        %v437 = vunpack.c.h.b16 %v338
        %v438 = vunpack.c.l.b16 %v339
        %v439 = vunpack.c.h.b16 %v339
        %v440 = vunpack.c.l.b16 %v340
        %v441 = vunpack.c.h.b16 %v340
        %v442 = vunpack.c.l.b16 %v341
        %v443 = vunpack.c.h.b16 %v341
        %v444 = vunpack.c.l.b16 %v342
        %v445 = vunpack.c.h.b16 %v342
        %v446 = vunpack.c.l.b16 %v343
        %v447 = vunpack.c.h.b16 %v343
        %v448 = vunpack.c.l.b16 %v344
        %v449 = vunpack.c.h.b16 %v344
        %v450 = vunpack.c.l.b16 %v345
        %v451 = vunpack.c.h.b16 %v345
        %v452 = vunpack.c.l.b16 %v346
        %v453 = vunpack.c.h.b16 %v346
        %v454 = vunpack.c.l.b16 %v347
        %v455 = vunpack.c.h.b16 %v347
        %v456 = vunpack.c.l.b16 %v348
        %v457 = vunpack.c.h.b16 %v348
        %v458 = vunpack.c.l.b16 %v349
        %v459 = vunpack.c.h.b16 %v349
        %v460 = vunpack.c.l.b16 %v350
        %v461 = vunpack.c.h.b16 %v350
        %v462 = vunpack.c.l.b16 %v351
        %v463 = vunpack.c.h.b16 %v351
        %v464 = vunpack.c.l.b16 %v352
        %v465 = vunpack.c.h.b16 %v352
        %v466 = vunpack.c.l.b16 %v353
        %v467 = vunpack.c.h.b16 %v353
        %v468 = vunpack.c.l.b16 %v354
        %v469 = vunpack.c.h.b16 %v354
        %v470 = vunpack.c.l.b16 %v355
        %v471 = vunpack.c.h.b16 %v355
        %v472 = vunpack.c.l.b16 %v356
        %v473 = vunpack.c.h.b16 %v356
        %v474 = vunpack.c.l.b16 %v357
        %v475 = vunpack.c.h.b16 %v357
        %v476 = vpack.c.b16 %v416, %v412
        %v477 = vpack.c.b16 %v417, %v413
        %v478 = vpack.c.b16 %v418, %v414
        %v479 = vpack.c.b16 %v419, %v415
        %v480 = vpack.c.b16 %v424, %v420
        %v481 = vpack.c.b16 %v425, %v421
        %v482 = vpack.c.b16 %v426, %v422
        %v483 = vpack.c.b16 %v427, %v423
        %v484 = vpack.c.b16 %v432, %v428
        %v485 = vpack.c.b16 %v433, %v429
        %v486 = vpack.c.b16 %v434, %v430
        %v487 = vpack.c.b16 %v435, %v431
        %v488 = vpack.c.b16 %v440, %v436
        %v489 = vpack.c.b16 %v441, %v437
        %v490 = vpack.c.b16 %v442, %v438
        %v491 = vpack.c.b16 %v443, %v439
        %v492 = vpack.c.b16 %v448, %v444
        %v493 = vpack.c.b16 %v449, %v445
        %v494 = vpack.c.b16 %v450, %v446
        %v495 = vpack.c.b16 %v451, %v447
        %v496 = vpack.c.b16 %v456, %v452
        %v497 = vpack.c.b16 %v457, %v453
        %v498 = vpack.c.b16 %v458, %v454
        %v499 = vpack.c.b16 %v459, %v455
        %v500 = vpack.c.b16 %v464, %v460
        %v501 = vpack.c.b16 %v465, %v461
        %v502 = vpack.c.b16 %v466, %v462
        %v503 = vpack.c.b16 %v467, %v463
        %v504 = vpack.c.b16 %v472, %v468
        %v505 = vpack.c.b16 %v473, %v469
        %v506 = vpack.c.b16 %v474, %v470
        %v507 = vpack.c.b16 %v475, %v471
        %540 = vmatprep.subr.bf16.mxu0 %v477
        %541 = vmatpush1.bf16.msra.mxu0 %v476
        %542 = vmatprep.subr.bf16.mxu0 %v481
        %543 = vmatpush1.bf16.msra.mxu0 %v480
        %544 = vmatprep.subr.bf16.mxu0 %v485
        %545 = vmatpush1.bf16.msra.mxu0 %v484
        %546 = vmatprep.subr.bf16.mxu0 %v489
        %547 = vmatpush1.bf16.msra.mxu0 %v488
        %548 = vmatprep.subr.bf16.mxu0 %v493
        %549 = vmatpush1.bf16.msra.mxu0 %v492
        %550 = vmatprep.subr.bf16.mxu0 %v497
        %551 = vmatpush1.bf16.msra.mxu0 %v496
        %552 = vmatprep.subr.bf16.mxu0 %v501
        %553 = vmatpush1.bf16.msra.mxu0 %v500
        %554 = vmatprep.subr.bf16.mxu0 %v505
        %555 = vmatpush1.bf16.msra.mxu0 %v504
        %556 = vmatprep.subr.bf16.mxu0 0
        %557 = vmatpush1.bf16.msra.mxu0 0
        %558 = vmatprep.subr.bf16.mxu0 0
        %559 = vmatpush1.bf16.msra.mxu0 0
        %560 = vmatprep.subr.bf16.mxu0 0
        %561 = vmatpush1.bf16.msra.mxu0 0
        %562 = vmatprep.subr.bf16.mxu0 0
        %563 = vmatpush1.bf16.msra.mxu0 0
        %564 = vmatprep.subr.bf16.mxu0 0
        %565 = vmatpush1.bf16.msra.mxu0 0
        %566 = vmatprep.subr.bf16.mxu0 0
        %567 = vmatpush1.bf16.msra.mxu0 0
        %568 = vmatprep.subr.bf16.mxu0 0
        %569 = vmatpush1.bf16.msra.mxu0 0
        %570 = vmatprep.subr.bf16.mxu0 0
        %571 = vmatpush1.bf16.msra.mxu0 0
        %572 = vmatprep.mubr.bf16.mxu0 0
        %573 = vmatmul.mubr.bf16.gmra.mrb[0].mxu0 %v325
        %v574 = vpop.f32.mrb[0].mxu0
        %v575 = vadd.f32 %v363, %v574
        %v576 = vpop.f32.mrb[0].mxu0
        %v577 = vadd.f32 %v367, %v576
        %v578 = vpop.f32.mrb[0].mxu0
        %v579 = vpop.f32.mrb[0].mxu0
        %580 = vdwg.mxu0
        %581 = vmatprep.subr.bf16.mxu0 %v479
        %582 = vmatpush1.bf16.msra.mxu0 %v478
        %583 = vmatprep.subr.bf16.mxu0 %v483
        %584 = vmatpush1.bf16.msra.mxu0 %v482
        %585 = vmatprep.subr.bf16.mxu0 %v487
        %586 = vmatpush1.bf16.msra.mxu0 %v486
        %587 = vmatprep.subr.bf16.mxu0 %v491
        %588 = vmatpush1.bf16.msra.mxu0 %v490
        %589 = vmatprep.subr.bf16.mxu0 %v495
        %590 = vmatpush1.bf16.msra.mxu0 %v494
        %591 = vmatprep.subr.bf16.mxu0 %v499
        %592 = vmatpush1.bf16.msra.mxu0 %v498
        %593 = vmatprep.subr.bf16.mxu0 %v503
        %594 = vmatpush1.bf16.msra.mxu0 %v502
        %595 = vmatprep.subr.bf16.mxu0 %v507
        %596 = vmatpush1.bf16.msra.mxu0 %v506
        %597 = vmatprep.subr.bf16.mxu0 0
        %598 = vmatpush1.bf16.msra.mxu0 0
        %599 = vmatprep.subr.bf16.mxu0 0
        %600 = vmatpush1.bf16.msra.mxu0 0
        %601 = vmatprep.subr.bf16.mxu0 0
        %602 = vmatpush1.bf16.msra.mxu0 0
        %603 = vmatprep.subr.bf16.mxu0 0
        %604 = vmatpush1.bf16.msra.mxu0 0
        %605 = vmatprep.subr.bf16.mxu0 0
        %606 = vmatpush1.bf16.msra.mxu0 0
        %607 = vmatprep.subr.bf16.mxu0 0
        %608 = vmatpush1.bf16.msra.mxu0 0
        %609 = vmatprep.subr.bf16.mxu0 0
        %610 = vmatpush1.bf16.msra.mxu0 0
        %611 = vmatprep.subr.bf16.mxu0 0
        %612 = vmatpush1.bf16.msra.mxu0 0
        %613 = vmatprep.mubr.bf16.mxu0 0
        %614 = vmatmul.mubr.bf16.gmra.mrb[0].mxu0 %v325
        %v615 = vpop.f32.mrb[0].mxu0
        %v616 = vadd.f32 %v371, %v615
        %v617 = vpop.f32.mrb[0].mxu0
        %v618 = vadd.f32 %v375, %v617
        %v619 = vpop.f32.mrb[0].mxu0
        %v620 = vpop.f32.mrb[0].mxu0
        %621 = vdwg.mxu0
        %v622 = vsub.f32 0.0, %v575
        %v623 = vsub.f32 0.0, %v577
        %v624 = vsub.f32 0.0, %v616
        %v625 = vsub.f32 0.0, %v618
        %v626 = vmul.f32 %v622, 1.442695
        %v627 = vpow.pop %v626
        %v628 = vmul.f32 %v623, 1.442695
        %v629 = vpow.pop %v628
        %v630 = vmul.f32 %v624, 1.442695
        %v631 = vpow.pop %v630
        %v632 = vmul.f32 %v625, 1.442695
        %v633 = vpow.pop %v632
        %v634 = vadd.f32 %v627, 1.0
        %v635 = vadd.f32 %v629, 1.0
        %v636 = vadd.f32 %v631, 1.0
        %v637 = vadd.f32 %v633, 1.0
        %v638 = vrcp.pop %v634
        %v639 = vrcp.pop %v635
        %v640 = vrcp.pop %v636
        %v641 = vrcp.pop %v637
        %v642 = vmul.f32 %v575, %v638
        %v643 = vmul.f32 %v577, %v639
        %v644 = vmul.f32 %v616, %v640
        %v645 = vmul.f32 %v618, %v641
        %v646 = vld [vmem:[#allocation2] sm:$0xff]
        %v647 = vpack.c.bf16 %v642, %v642
        %v648 = vpack.c.bf16 %v643, %v643
        %v649 = vpack.c.bf16 %v644, %v644
        %v650 = vpack.c.bf16 %v645, %v645
        %v651 = vld [vmem:[#allocation8] sm:$0xf]
        %v652 = vld [vmem:[#allocation8 + $0x4] sm:$0xf]
        %v653 = vld [vmem:[#allocation8 + $0x8] sm:$0xf]
        %v654 = vld [vmem:[#allocation8 + $0xc] sm:$0xf]
        %v655 = vld [vmem:[#allocation8 + $0x10] sm:$0xf]
        %v656 = vld [vmem:[#allocation8 + $0x14] sm:$0xf]
        %v657 = vld [vmem:[#allocation8 + $0x18] sm:$0xf]
        %v658 = vld [vmem:[#allocation8 + $0x1c] sm:$0xf]
        %v659 = vld [vmem:[#allocation8 + $0x20] sm:$0xf]
        %v660 = vld [vmem:[#allocation8 + $0x24] sm:$0xf]
        %v661 = vld [vmem:[#allocation8 + $0x28] sm:$0xf]
        %v662 = vld [vmem:[#allocation8 + $0x2c] sm:$0xf]
        %v663 = vld [vmem:[#allocation8 + $0x30] sm:$0xf]
        %v664 = vld [vmem:[#allocation8 + $0x34] sm:$0xf]
        %v665 = vld [vmem:[#allocation8 + $0x38] sm:$0xf]
        %v666 = vld [vmem:[#allocation8 + $0x3c] sm:$0xf]
        %v667 = vld [vmem:[#allocation8 + $0x40] sm:$0xf]
        %v668 = vld [vmem:[#allocation8 + $0x44] sm:$0xf]
        %v669 = vld [vmem:[#allocation8 + $0x48] sm:$0xf]
        %v670 = vld [vmem:[#allocation8 + $0x4c] sm:$0xf]
        %v671 = vld [vmem:[#allocation8 + $0x50] sm:$0xf]
        %v672 = vld [vmem:[#allocation8 + $0x54] sm:$0xf]
        %v673 = vld [vmem:[#allocation8 + $0x58] sm:$0xf]
        %v674 = vld [vmem:[#allocation8 + $0x5c] sm:$0xf]
        %v675 = vld [vmem:[#allocation8 + $0x60] sm:$0xf]
        %v676 = vld [vmem:[#allocation8 + $0x64] sm:$0xf]
        %v677 = vld [vmem:[#allocation8 + $0x68] sm:$0xf]
        %v678 = vld [vmem:[#allocation8 + $0x6c] sm:$0xf]
        %v679 = vld [vmem:[#allocation8 + $0x70] sm:$0xf]
        %v680 = vld [vmem:[#allocation8 + $0x74] sm:$0xf]
        %v681 = vld [vmem:[#allocation8 + $0x78] sm:$0xf]
        %v682 = vld [vmem:[#allocation8 + $0x7c] sm:$0xf]
        %v683 = vld [vmem:[#allocation8 + $0x80] sm:$0xf]
        %v684 = vld [vmem:[#allocation8 + $0x84] sm:$0xf]
        %v685 = vld [vmem:[#allocation8 + $0x88] sm:$0xf]
        %v686 = vld [vmem:[#allocation8 + $0x8c] sm:$0xf]
        %v687 = vld [vmem:[#allocation8 + $0x90] sm:$0xf]
        %v688 = vld [vmem:[#allocation8 + $0x94] sm:$0xf]
        %v689 = vld [vmem:[#allocation8 + $0x98] sm:$0xf]
        %v690 = vld [vmem:[#allocation8 + $0x9c] sm:$0xf]
        %v691 = vld [vmem:[#allocation8 + $0xa0] sm:$0xf]
        %v692 = vld [vmem:[#allocation8 + $0xa4] sm:$0xf]
        %v693 = vld [vmem:[#allocation8 + $0xa8] sm:$0xf]
        %v694 = vld [vmem:[#allocation8 + $0xac] sm:$0xf]
        %v695 = vld [vmem:[#allocation8 + $0xb0] sm:$0xf]
        %v696 = vld [vmem:[#allocation8 + $0xb4] sm:$0xf]
        %v697 = vld [vmem:[#allocation8 + $0xb8] sm:$0xf]
        %v698 = vld [vmem:[#allocation8 + $0xbc] sm:$0xf]
        %v699 = vld [vmem:[#allocation8 + $0xc0] sm:$0xf]
        %v700 = vld [vmem:[#allocation8 + $0xc4] sm:$0xf]
        %v701 = vld [vmem:[#allocation8 + $0xc8] sm:$0xf]
        %v702 = vld [vmem:[#allocation8 + $0xcc] sm:$0xf]
        %v703 = vld [vmem:[#allocation8 + $0xd0] sm:$0xf]
        %v704 = vld [vmem:[#allocation8 + $0xd4] sm:$0xf]
        %v705 = vld [vmem:[#allocation8 + $0xd8] sm:$0xf]
        %v706 = vld [vmem:[#allocation8 + $0xdc] sm:$0xf]
        %v707 = vld [vmem:[#allocation8 + $0xe0] sm:$0xf]
        %v708 = vld [vmem:[#allocation8 + $0xe4] sm:$0xf]
        %v709 = vld [vmem:[#allocation8 + $0xe8] sm:$0xf]
        %v710 = vld [vmem:[#allocation8 + $0xec] sm:$0xf]
        %v711 = vld [vmem:[#allocation8 + $0xf0] sm:$0xf]
        %v712 = vld [vmem:[#allocation8 + $0xf4] sm:$0xf]
        %v713 = vld [vmem:[#allocation8 + $0xf8] sm:$0xf]
        %v714 = vld [vmem:[#allocation8 + $0xfc] sm:$0xf]
        %v779 = vunpack.c.l.b16 %v651
        %v780 = vunpack.c.l.b16 %v652
        %v781 = vunpack.c.l.b16 %v653
        %v782 = vunpack.c.l.b16 %v654
        %v783 = vunpack.c.l.b16 %v655
        %v784 = vunpack.c.l.b16 %v656
        %v785 = vunpack.c.l.b16 %v657
        %v786 = vunpack.c.l.b16 %v658
        %v787 = vunpack.c.l.b16 %v659
        %v788 = vunpack.c.l.b16 %v660
        %v789 = vunpack.c.l.b16 %v661
        %v790 = vunpack.c.l.b16 %v662
        %v791 = vunpack.c.l.b16 %v663
        %v792 = vunpack.c.l.b16 %v664
        %v793 = vunpack.c.l.b16 %v665
        %v794 = vunpack.c.l.b16 %v666
        %v795 = vunpack.c.l.b16 %v667
        %v796 = vunpack.c.l.b16 %v668
        %v797 = vunpack.c.l.b16 %v669
        %v798 = vunpack.c.l.b16 %v670
        %v799 = vunpack.c.l.b16 %v671
        %v800 = vunpack.c.l.b16 %v672
        %v801 = vunpack.c.l.b16 %v673
        %v802 = vunpack.c.l.b16 %v674
        %v803 = vunpack.c.l.b16 %v675
        %v804 = vunpack.c.l.b16 %v676
        %v805 = vunpack.c.l.b16 %v677
        %v806 = vunpack.c.l.b16 %v678
        %v807 = vunpack.c.l.b16 %v679
        %v808 = vunpack.c.l.b16 %v680
        %v809 = vunpack.c.l.b16 %v681
        %v810 = vunpack.c.l.b16 %v682
        %v811 = vunpack.c.l.b16 %v683
        %v812 = vunpack.c.l.b16 %v684
        %v813 = vunpack.c.l.b16 %v685
        %v814 = vunpack.c.l.b16 %v686
        %v815 = vunpack.c.l.b16 %v687
        %v816 = vunpack.c.l.b16 %v688
        %v817 = vunpack.c.l.b16 %v689
        %v818 = vunpack.c.l.b16 %v690
        %v819 = vunpack.c.l.b16 %v691
        %v820 = vunpack.c.l.b16 %v692
        %v821 = vunpack.c.l.b16 %v693
        %v822 = vunpack.c.l.b16 %v694
        %v823 = vunpack.c.l.b16 %v695
        %v824 = vunpack.c.l.b16 %v696
        %v825 = vunpack.c.l.b16 %v697
        %v826 = vunpack.c.l.b16 %v698
        %v827 = vunpack.c.l.b16 %v699
        %v828 = vunpack.c.l.b16 %v700
        %v829 = vunpack.c.l.b16 %v701
        %v830 = vunpack.c.l.b16 %v702
        %v831 = vunpack.c.l.b16 %v703
        %v832 = vunpack.c.l.b16 %v704
        %v833 = vunpack.c.l.b16 %v705
        %v834 = vunpack.c.l.b16 %v706
        %v835 = vunpack.c.l.b16 %v707
        %v836 = vunpack.c.l.b16 %v708
        %v837 = vunpack.c.l.b16 %v709
        %v838 = vunpack.c.l.b16 %v710
        %v839 = vunpack.c.l.b16 %v711
        %v840 = vunpack.c.l.b16 %v712
        %v841 = vunpack.c.l.b16 %v713
        %v842 = vunpack.c.l.b16 %v714
        %v843 = vpack.c.b16 %v780, %v779
        %v844 = vpack.c.b16 %v782, %v781
        %v845 = vpack.c.b16 %v784, %v783
        %v846 = vpack.c.b16 %v786, %v785
        %v847 = vpack.c.b16 %v788, %v787
        %v848 = vpack.c.b16 %v790, %v789
        %v849 = vpack.c.b16 %v792, %v791
        %v850 = vpack.c.b16 %v794, %v793
        %v851 = vpack.c.b16 %v796, %v795
        %v852 = vpack.c.b16 %v798, %v797
        %v853 = vpack.c.b16 %v800, %v799
        %v854 = vpack.c.b16 %v802, %v801
        %v855 = vpack.c.b16 %v804, %v803
        %v856 = vpack.c.b16 %v806, %v805
        %v857 = vpack.c.b16 %v808, %v807
        %v858 = vpack.c.b16 %v810, %v809
        %v859 = vpack.c.b16 %v812, %v811
        %v860 = vpack.c.b16 %v814, %v813
        %v861 = vpack.c.b16 %v816, %v815
        %v862 = vpack.c.b16 %v818, %v817
        %v863 = vpack.c.b16 %v820, %v819
        %v864 = vpack.c.b16 %v822, %v821
        %v865 = vpack.c.b16 %v824, %v823
        %v866 = vpack.c.b16 %v826, %v825
        %v867 = vpack.c.b16 %v828, %v827
        %v868 = vpack.c.b16 %v830, %v829
        %v869 = vpack.c.b16 %v832, %v831
        %v870 = vpack.c.b16 %v834, %v833
        %v871 = vpack.c.b16 %v836, %v835
        %v872 = vpack.c.b16 %v838, %v837
        %v873 = vpack.c.b16 %v840, %v839
        %v874 = vpack.c.b16 %v842, %v841
        %907 = vmatprep.subr.bf16.mxu0 0
        %908 = vmatpush1.bf16.msra.mxu0 %v843
        %909 = vmatprep.subr.bf16.mxu0 0
        %910 = vmatpush1.bf16.msra.mxu0 %v844
        %911 = vmatprep.subr.bf16.mxu0 0
        %912 = vmatpush1.bf16.msra.mxu0 %v845
        %913 = vmatprep.subr.bf16.mxu0 0
        %914 = vmatpush1.bf16.msra.mxu0 %v846
        %915 = vmatprep.subr.bf16.mxu0 0
        %916 = vmatpush1.bf16.msra.mxu0 %v847
        %917 = vmatprep.subr.bf16.mxu0 0
        %918 = vmatpush1.bf16.msra.mxu0 %v848
        %919 = vmatprep.subr.bf16.mxu0 0
        %920 = vmatpush1.bf16.msra.mxu0 %v849
        %921 = vmatprep.subr.bf16.mxu0 0
        %922 = vmatpush1.bf16.msra.mxu0 %v850
        %923 = vmatprep.subr.bf16.mxu0 0
        %924 = vmatpush1.bf16.msra.mxu0 %v851
        %925 = vmatprep.subr.bf16.mxu0 0
        %926 = vmatpush1.bf16.msra.mxu0 %v852
        %927 = vmatprep.subr.bf16.mxu0 0
        %928 = vmatpush1.bf16.msra.mxu0 %v853
        %929 = vmatprep.subr.bf16.mxu0 0
        %930 = vmatpush1.bf16.msra.mxu0 %v854
        %931 = vmatprep.subr.bf16.mxu0 0
        %932 = vmatpush1.bf16.msra.mxu0 %v855
        %933 = vmatprep.subr.bf16.mxu0 0
        %934 = vmatpush1.bf16.msra.mxu0 %v856
        %935 = vmatprep.subr.bf16.mxu0 0
        %936 = vmatpush1.bf16.msra.mxu0 %v857
        %937 = vmatprep.subr.bf16.mxu0 0
        %938 = vmatpush1.bf16.msra.mxu0 %v858
        %939 = vmatprep.mubr.bf16.mxu0 %v648
        %940 = vmatmul.mubr.bf16.gmra.mrb[0].mxu0 %v647
        %v941 = vpop.f32.mrb[0].mxu0
        %v942 = vadd.f32 0.0, %v941
        %v943 = vpop.f32.mrb[0].mxu0
        %v944 = vpop.f32.mrb[0].mxu0
        %v945 = vpop.f32.mrb[0].mxu0
        %946 = vdwg.mxu0
        %947 = vmatprep.subr.bf16.mxu0 0
        %948 = vmatpush1.bf16.msra.mxu0 %v859
        %949 = vmatprep.subr.bf16.mxu0 0
        %950 = vmatpush1.bf16.msra.mxu0 %v860
        %951 = vmatprep.subr.bf16.mxu0 0
        %952 = vmatpush1.bf16.msra.mxu0 %v861
        %953 = vmatprep.subr.bf16.mxu0 0
        %954 = vmatpush1.bf16.msra.mxu0 %v862
        %955 = vmatprep.subr.bf16.mxu0 0
        %956 = vmatpush1.bf16.msra.mxu0 %v863
        %957 = vmatprep.subr.bf16.mxu0 0
        %958 = vmatpush1.bf16.msra.mxu0 %v864
        %959 = vmatprep.subr.bf16.mxu0 0
        %960 = vmatpush1.bf16.msra.mxu0 %v865
        %961 = vmatprep.subr.bf16.mxu0 0
        %962 = vmatpush1.bf16.msra.mxu0 %v866
        %963 = vmatprep.subr.bf16.mxu0 0
        %964 = vmatpush1.bf16.msra.mxu0 %v867
        %965 = vmatprep.subr.bf16.mxu0 0
        %966 = vmatpush1.bf16.msra.mxu0 %v868
        %967 = vmatprep.subr.bf16.mxu0 0
        %968 = vmatpush1.bf16.msra.mxu0 %v869
        %969 = vmatprep.subr.bf16.mxu0 0
        %970 = vmatpush1.bf16.msra.mxu0 %v870
        %971 = vmatprep.subr.bf16.mxu0 0
        %972 = vmatpush1.bf16.msra.mxu0 %v871
        %973 = vmatprep.subr.bf16.mxu0 0
        %974 = vmatpush1.bf16.msra.mxu0 %v872
        %975 = vmatprep.subr.bf16.mxu0 0
        %976 = vmatpush1.bf16.msra.mxu0 %v873
        %977 = vmatprep.subr.bf16.mxu0 0
        %978 = vmatpush1.bf16.msra.mxu0 %v874
        %979 = vmatprep.mubr.bf16.mxu0 %v650
        %980 = vmatmul.mubr.bf16.gmra.mrb[0].mxu0 %v649
        %v981 = vpop.f32.mrb[0].mxu0
        %v982 = vadd.f32 %v942, %v981
        %v983 = vpop.f32.mrb[0].mxu0
        %v984 = vpop.f32.mrb[0].mxu0
        %v985 = vpop.f32.mrb[0].mxu0
        %986 = vdwg.mxu0
        %v987 = vadd.f32 %v646, %v982
        %988 = vst [vmem:[#allocation2] sm:$0xff] %v987
        // Predicated region
        $region57: #{feed_forward_pallas.1} parent=39 // pred_check
          %p989 = pneg %p319
        $region58: #{feed_forward_pallas.1} parent=39 // pred_check_branch
          %991 = sbr.rel (%p989) target = $region60
        $region59: #{feed_forward_pallas.1} parent=39 // pred_region
          %v992 = vld [vmem:[#allocation2] sm:$0xff]
          %v993 = vld [vmem:[%s4] sm:$0x1]
          %v995 = vlaneseq
          %v996 = vshrl.u32 %v995, 7
          %v997 = vsub.s32 0, %v996
          %v998 = vrot.slane %v993, %v997
          %v1000 = vadd.f32 %v992, %v998
          %1001 = vst [vmem:[%s310] sm:$0xff] %v1000
        $region60: #{feed_forward_pallas.1} parent=39 // pred_fallthru
          _
        %s1002 = sand.u32 %s168, 1
        %s1003 = scalar_lea.sflag [#allocation5], %s1002
        %s1004 = sand.u32 %s168, 1
        %s1005 = smul.addr %s1004, 8
        %s1006 = scalar_lea.vmem [#allocation9], %s1005
        // Predicated region
        $region61: #{feed_forward_pallas.1} parent=39 // pred_check
          %p1007 = pneg %p178
        $region62: #{feed_forward_pallas.1} parent=39 // pred_check_branch
          %1009 = sbr.rel (%p1007) target = $region64
        $region63: #{feed_forward_pallas.1} parent=39 // pred_region
          %s1011 = ssub.s32 128, 128
          %1012 = vsyncadd %s1003, %s1011
          %s1013 = smul.addr %s27, 128
          %s1014 = scalar_lea.hbm %s5, %s1013
          %s1016 = sshll.u32 %s1006, 4
          %s1017 = int_to_ptr.vmem [resolvable:$true] %s1016
          %1019 = dma.vmem_to_hbm [thread:$0]  %s1017, 128, %s1014, %s1003
        $region64: #{feed_forward_pallas.1} parent=39 // pred_fallthru
          _
      $region40: #{feed_forward_pallas.1} parent=5 // pred_fallthru
        _
      %p1020 = scmp.le.s32.totalorder 2, %s18
      // Predicated region
      $region65: #{feed_forward_pallas.1} parent=5 // pred_check
        %p1021 = pneg %p1020
      $region66: #{feed_forward_pallas.1} parent=5 // pred_check_branch
        %1023 = sbr.rel (%p1021) target = $region68
      $region67: #{feed_forward_pallas.1} parent=5 // pred_region
        %s1024 = ssub.s32 %s18, 2
        // Predicated region
        $region69: #{feed_forward_pallas.1} parent=67 // pred_check
          %p1025 = pneg %p184
        $region70: #{feed_forward_pallas.1} parent=67 // pred_check_branch
          %1027 = sbr.rel (%p1025) target = $region72
        $region71: #{feed_forward_pallas.1} parent=67 // pred_region
          %s1028 = sand.u32 %s169, 1
          %s1029 = scalar_lea.sflag [#allocation5], %s1028
          %s1030 = sand.u32 %s169, 1
          %s1031 = smul.addr %s1030, 8
          %s1032 = scalar_lea.vmem [#allocation9], %s1031
          %1033 = dma.done %s1029, 128
        $region72: #{feed_forward_pallas.1} parent=67 // pred_fallthru
          _
      $region68: #{feed_forward_pallas.1} parent=5 // pred_fallthru
        _
    $region6: #{feed_forward_pallas.1} parent=1 // loop_footer
      %s22 = sadd.s32 1, %s18
    $region7: #{feed_forward_pallas.1} parent=1 // loop_footer_branch
      %17 = sbr.rel target = $region3
    $region8: #{feed_forward_pallas.1} parent=1 // loop_exit
      _
    %1034 = vsyncpa [#allocation4], 1
    %s1035 = scalar_lea.sflag [#allocation4], 1
    %1036 = vsyncpa %s1035, 1
    %1037 = vsyncpa [#allocation7], 1
    %1038 = vsyncpa [#allocation5], 1
    %s1039 = scalar_lea.sflag [#allocation5], 1
    %1040 = vsyncpa %s1039, 1

</llo_original>
